<compile_context>
chip_gen: v7x
topology: tpu7x:2x2x1
jax: 0.10.0
libtpu: 0.0.40
codegen_flags: <defaults>
</compile_context>

<pallas_src>
import functools

import numpy as np
import jax
import jax.numpy as jnp
from jax import lax
from jax.experimental import pallas as pl
from jax.experimental.pallas import tpu as pltpu


def _round_up(x, m):
    return ((x + m - 1) // m) * m


# --------------------------------------------------------------------------- #
# Kernel: per-(image, chunk, spatial-tile) focal + huber partial sums.
# --------------------------------------------------------------------------- #
def _level_kernel(x_ref, t_ref, bo_ref, bt_ref, cls_acc_ref, box_acc_ref, *,
                  alpha, gamma, delta, hw, s_blk, tiles_per_chunk, any_partial,
                  bt_transposed_in_kernel):
    """Block shapes:
      x_ref      : (1, A, C, S)   logits (native NCHW element order)
      t_ref      : (1, A, 1, S)   int8/int32 class target per anchor/position
      bo_ref     : (1, A4, S)     box regression outputs
      bt_ref     : (1, S, A4)  if bt_transposed_in_kernel else (1, A4, S)
      *_acc_ref  : (1, 1, 1, S)   resident f32 accumulators (per image/chunk)
    """
    @pl.when(pl.program_id(2) == 0)
    def _init():
        cls_acc_ref[...] = jnp.zeros_like(cls_acc_ref)
        box_acc_ref[...] = jnp.zeros_like(box_acc_ref)

    n_anchors = x_ref.shape[1]
    n_cls = x_ref.shape[2]
    s = x_ref.shape[3]

    cls_iota = lax.broadcasted_iota(jnp.int32, (n_cls, 1), 0)

    # ---- focal loss: loop over anchors so temporaries stay (C, S)-sized ----
    def anchor_body(a, acc_row):
        x = x_ref[0, pl.ds(a, 1)][0].astype(jnp.float32)           # (C, S)
        t = t_ref[0, pl.ds(a, 1), 0].astype(jnp.int32)             # (1, S)
        y = jnp.logical_and(t == cls_iota, t >= 0).astype(jnp.float32)  # (C, S)
        valid = (t != -2).astype(jnp.float32)                      # (1, S)
        # where(pos, a*L, (1-a)*L) * valid == L * ((1-a)*valid + (2a-1)*y)
        w = (1.0 - alpha) * valid + (2.0 * alpha - 1.0) * y
        # Stable focal: softplus(-|x|) is reused for the CE and the modulator.
        sp = jnp.log1p(jnp.exp(-jnp.abs(x)))
        relu_nx = jnp.maximum(-x, 0.0)
        xy = x * y
        ce = jnp.maximum(x, 0.0) - xy + sp                         # BCE w/ logits
        mod = jnp.exp(gamma * (-xy - sp - relu_nx))                # exponent <= 0
        contrib = mod * ce * w
        return acc_row + jnp.sum(contrib, axis=0, keepdims=True)   # (1, S)

    cls_row = lax.fori_loop(0, n_anchors, anchor_body,
                            jnp.zeros((1, s), jnp.float32))

    # ---- huber loss (whole (A4, S) tile at once) ----
    bo = bo_ref[0].astype(jnp.float32)                             # (A4, S)
    if bt_transposed_in_kernel:
        bt = jnp.swapaxes(bt_ref[0], 0, 1).astype(jnp.float32)     # (S,A4)->(A4,S)
    else:
        bt = bt_ref[0].astype(jnp.float32)                         # (A4, S)
    abs_err = jnp.abs(bt - bo)
    quad = jnp.minimum(abs_err, delta)
    lin = abs_err - quad
    hub = 0.5 * quad * quad + delta * lin
    # Exact-zero sentinel masking matches the reference semantics: a genuine
    # target coordinate that is exactly 0.0 is dropped (inherited behavior).
    hub = jnp.where(bt != 0.0, hub, 0.0)
    box_row = jnp.sum(hub, axis=0, keepdims=True)                  # (1, S)

    # ---- accumulate; lane-mask only tiles that can contain garbage ----
    if any_partial:
        start = (pl.program_id(1) * tiles_per_chunk + pl.program_id(2)) * s_blk
        is_full = start + s_blk <= hw

        @pl.when(is_full)
        def _acc_full():
            cls_acc_ref[...] += cls_row.reshape(cls_acc_ref.shape)
            box_acc_ref[...] += box_row.reshape(box_acc_ref.shape)

        @pl.when(jnp.logical_not(is_full))
        def _acc_masked():
            # Any garbage read past the end of the level stays in its own
            # lanes (all reductions above mix anchors / sublanes only), so a
            # final lane select is sufficient even if the garbage is NaN/Inf.
            lane = start + lax.broadcasted_iota(jnp.int32, (1, s), 1)
            keep = lane < hw
            cls_acc_ref[...] += jnp.where(keep, cls_row, 0.0).reshape(
                cls_acc_ref.shape)
            box_acc_ref[...] += jnp.where(keep, box_row, 0.0).reshape(
                box_acc_ref.shape)
    else:
        cls_acc_ref[...] += cls_row.reshape(cls_acc_ref.shape)
        box_acc_ref[...] += box_row.reshape(box_acc_ref.shape)


# --------------------------------------------------------------------------- #
# Wrapper helpers.
# --------------------------------------------------------------------------- #
@functools.lru_cache(maxsize=None)
def _can_transpose_in_kernel(rows, cols):
    """Compile probe: does Mosaic lower an in-kernel (rows, cols) f32 transpose?"""
    def _k(src_ref, dst_ref):
        dst_ref[...] = jnp.swapaxes(src_ref[...], 0, 1)
    try:
        fn = pl.pallas_call(
            _k, out_shape=jax.ShapeDtypeStruct((cols, rows), jnp.float32))
        jax.jit(fn).lower(
            jax.ShapeDtypeStruct((rows, cols), jnp.float32)).compile()
        return True
    except Exception:  # any lowering failure -> wrapper-transpose fallback
        return False


def _choose_spatial_tile(A, C, A4, hw, tgt_itemsize, spatial_tile, vmem_budget):
    """Pick the spatial tile so the per-step working set fits the VMEM budget."""
    if spatial_tile is not None:
        cap = max(128, (int(spatial_tile) // 128) * 128)
    else:
        c_pad = _round_up(C, 8)
        a4_pad = _round_up(A4, 8)
        # Bytes of VMEM per spatial position (conservative: assumes the
        # in-kernel-transposed box-target block, which is lane-padded to 128).
        per_pos_in = 4 * A * c_pad + tgt_itemsize * A + 4 * a4_pad + 4 * 128
        per_pos_tmp = 32 * c_pad + 20 * a4_pad + 4 * 128 + 32
        per_pos = 2 * per_pos_in + per_pos_tmp          # inputs double-buffered
        cap = max(128, (int(vmem_budget) // per_pos // 128) * 128)
    if hw <= cap:
        return hw, 1, False                             # single full-extent tile
    n_tiles = -(-hw // cap)
    return cap, n_tiles, (hw % cap) != 0


def _level_partial_sums(cls_out, cls_tgt, box_out, box_tgt, *, num_classes,
                        alpha, gamma, delta, spatial_tile, parallel_chunks,
                        vmem_budget_bytes, box_transpose_in_kernel):
    """Per-image unnormalized focal / huber sums for one pyramid level.

    cls_out: [B, A*C, H, W]   cls_tgt: [B, H, W, A] int
    box_out: [B, A*4, H, W]   box_tgt: [B, H, W, A*4]
    Returns (cls_sum[B], box_sum[B]).
    """
    B, AC, H, W = cls_out.shape
    A = cls_tgt.shape[-1]
    C = int(num_classes)
    assert AC == A * C, "cls_outputs channels must equal num_anchors*num_classes"
    A4 = box_tgt.shape[-1]
    assert box_out.shape[1] == A4
    HW = H * W

    tgt_dtype = jnp.int8 if C <= 127 else jnp.int32
    tgt_itemsize = jnp.dtype(tgt_dtype).itemsize

    s_blk, n_tiles, ragged = _choose_spatial_tile(
        A, C, A4, HW, tgt_itemsize, spatial_tile, vmem_budget_bytes)

    if box_transpose_in_kernel is None:
        inkernel_t = _can_transpose_in_kernel(s_blk, A4)
    else:
        inkernel_t = bool(box_transpose_in_kernel)

    n_chunks = max(1, min(int(parallel_chunks), n_tiles))
    tpc = -(-n_tiles // n_chunks)
    any_partial = ragged or (n_chunks * tpc != n_tiles)
    last_blk = n_tiles - 1

    def sp_idx(c, t):
        # Clamp phantom tiles (uneven chunking) onto the last real block; their
        # contribution is fully lane-masked inside the kernel.
        return jnp.minimum(c * tpc + t, last_blk)

    # Views (the big conv activations are never relaid out in the wrapper).
    logits_v = cls_out.reshape(B, A, C, HW)
    tgt_v = jnp.transpose(cls_tgt.astype(tgt_dtype),
                          (0, 3, 1, 2)).reshape(B, A, 1, HW)       # small copy
    box_out_v = box_out.reshape(B, A4, HW)
    if inkernel_t:
        box_tgt_v = box_tgt.reshape(B, HW, A4)                     # free view
        bt_spec = pl.BlockSpec((1, s_blk, A4),
                               lambda b, c, t: (b, sp_idx(c, t), 0))
    else:
        # Fallback only when the probe says the transpose cannot be lowered.
        box_tgt_v = jnp.transpose(box_tgt, (0, 3, 1, 2)).reshape(B, A4, HW)
        bt_spec = pl.BlockSpec((1, A4, s_blk),
                               lambda b, c, t: (b, 0, sp_idx(c, t)))

    kernel = functools.partial(
        _level_kernel, alpha=float(alpha), gamma=float(gamma),
        delta=float(delta), hw=HW, s_blk=s_blk, tiles_per_chunk=tpc,
        any_partial=any_partial, bt_transposed_in_kernel=inkernel_t)

    cls_acc, box_acc = pl.pallas_call(
        kernel,
        out_shape=(jax.ShapeDtypeStruct((B, n_chunks, 1, s_blk), jnp.float32),
                   jax.ShapeDtypeStruct((B, n_chunks, 1, s_blk), jnp.float32)),
        grid=(B, n_chunks, tpc),
        in_specs=[
            pl.BlockSpec((1, A, C, s_blk),
                         lambda b, c, t: (b, 0, 0, sp_idx(c, t))),
            pl.BlockSpec((1, A, 1, s_blk),
                         lambda b, c, t: (b, 0, 0, sp_idx(c, t))),
            pl.BlockSpec((1, A4, s_blk),
                         lambda b, c, t: (b, 0, sp_idx(c, t))),
            bt_spec,
        ],
        out_specs=(
            pl.BlockSpec((1, 1, 1, s_blk), lambda b, c, t: (b, c, 0, 0)),
            pl.BlockSpec((1, 1, 1, s_blk), lambda b, c, t: (b, c, 0, 0)),
        ),
        compiler_params=pltpu.CompilerParams(
            dimension_semantics=("parallel", "parallel", "arbitrary"),
            vmem_limit_bytes=32 * 1024 * 1024),
    )(logits_v, tgt_v, box_out_v, box_tgt_v)

    return jnp.sum(cls_acc, axis=(1, 2, 3)), jnp.sum(box_acc, axis=(1, 2, 3))


# --------------------------------------------------------------------------- #
# DetectionLoss.forward equivalent.
# --------------------------------------------------------------------------- #
def detection_loss(cls_outputs, box_outputs, cls_targets, box_targets,
                   num_positives, has_box=None, *,
                   num_classes, alpha, gamma, delta,
                   box_loss_weight, cls_loss_weight,
                   spatial_tile=None, parallel_chunks=2,
                   vmem_budget_bytes=12 * 1024 * 1024,
                   box_transpose_in_kernel=None):
    if isinstance(num_positives, (list, tuple)):
        num_positives = jnp.stack(num_positives)
    num_positives_sum = jnp.sum(num_positives) + 1.0
    B = cls_outputs[0].shape[0]
    if has_box is None:
        hb = jnp.ones((B,), jnp.float32)
    else:
        hb = jnp.reshape(has_box, (B,)).astype(jnp.float32)

    cls_losses, box_losses = [], []
    for l in range(len(cls_outputs)):
        cls_pi, box_pi = _level_partial_sums(
            cls_outputs[l], cls_targets[l], box_outputs[l], box_targets[l],
            num_classes=num_classes, alpha=alpha, gamma=gamma, delta=delta,
            spatial_tile=spatial_tile, parallel_chunks=parallel_chunks,
            vmem_budget_bytes=vmem_budget_bytes,
            box_transpose_in_kernel=box_transpose_in_kernel)
        # Per-image has_box weighting + normalization in tiny glue.
        cls_losses.append(jnp.sum(cls_pi * hb) / num_positives_sum)
        box_losses.append(jnp.sum(box_pi * hb) / (num_positives_sum * 4.0))

    cls_loss = jnp.sum(jnp.stack(cls_losses))
    box_loss = jnp.sum(jnp.stack(box_losses))
    total_loss = cls_loss_weight * cls_loss + box_loss_weight * box_loss
    return total_loss, cls_loss, box_loss
    # TODO(synk): concatenate the tiniest pyramid levels' streams into a single
    # launch to amortize the remaining per-level fixed cost.


# --------------------------------------------------------------------------- #
# Pure-JAX reference (mirrors the PyTorch code) for validation.
# --------------------------------------------------------------------------- #
def _ref_detection_loss(cls_outputs, box_outputs, cls_targets, box_targets,
                        num_positives, has_box, *, num_classes, alpha, gamma,
                        delta, box_loss_weight, cls_loss_weight):
    hb = None if has_box is None else has_box.reshape(-1, 1, 1, 1)
    npos = jnp.sum(num_positives) + 1.0
    cls_losses, box_losses = [], []
    for l in range(len(cls_outputs)):
        ct = cls_targets[l]
        nonneg = ct >= 0
        oh = jax.nn.one_hot(jnp.where(nonneg, ct, 0), num_classes)
        oh = jnp.where(nonneg[..., None], oh, 0.0)
        bs, h, w, A, C = oh.shape
        oh2 = oh.reshape(bs, h, w, A * C)
        logits = jnp.transpose(cls_outputs[l], (0, 2, 3, 1))
        ce = (jnp.maximum(logits, 0.0) - logits * oh2
              + jnp.log1p(jnp.exp(-jnp.abs(logits))))
        neg = -logits
        mod = jnp.exp(gamma * oh2 * neg - gamma * jnp.log1p(jnp.exp(neg)))
        loss = mod * ce
        wl = jnp.where(oh2 == 1.0, alpha * loss, (1.0 - alpha) * loss) / npos
        if hb is not None:
            wl = wl * hb
        wl = wl.reshape(bs, h, w, A, C) * (ct != -2)[..., None].astype(jnp.float32)
        cls_losses.append(jnp.sum(wl))

        bo = jnp.transpose(box_outputs[l], (0, 2, 3, 1))
        bt = box_targets[l]
        abs_err = jnp.abs(bt - bo)
        quad = jnp.minimum(abs_err, delta)
        lin = abs_err - quad
        hub = (0.5 * quad * quad + delta * lin) * (bt != 0.0).astype(jnp.float32)
        if hb is not None:
            hub = hub * hb
        box_losses.append(jnp.sum(hub) / (npos * 4.0))
    cls_loss = jnp.sum(jnp.stack(cls_losses))
    box_loss = jnp.sum(jnp.stack(box_losses))
    total = cls_loss_weight * cls_loss + box_loss_weight * box_loss
    return total, cls_loss, box_loss


if __name__ == "__main__":
    config = dict(num_classes=4, alpha=0.25, gamma=2.0, delta=0.1,
                  box_loss_weight=50.0, cls_loss_weight=1.0)
    B, A, C = 2, 9, config["num_classes"]

    def make_inputs(key, level_hw):
        cls_outputs, box_outputs, cls_targets, box_targets = [], [], [], []
        for (H, W) in level_hw:
            key, k1, k2, k3, k4, k5 = jax.random.split(key, 6)
            cls_outputs.append(jax.random.normal(k1, (B, A * C, H, W), jnp.float32))
            box_outputs.append(jax.random.normal(k2, (B, A * 4, H, W), jnp.float32))
            cls_targets.append(
                jax.random.randint(k3, (B, H, W, A), -2, C).astype(jnp.int32))
            bt = jax.random.normal(k4, (B, H, W, A * 4), jnp.float32)
            keep = jax.random.bernoulli(k5, 0.5, (B, H, W, A * 4))
            box_targets.append(jnp.where(keep, bt, 0.0))
        return cls_outputs, box_outputs, cls_targets, box_targets

    key = jax.random.PRNGKey(0)
    num_positives = jnp.array([3.0, 5.0], jnp.float32)

    cases = [
        # (level sizes, has_box, extra kwargs)
        ([(8, 8), (4, 4)], None, {}),                               # tiny, single-tile
        ([(8, 8), (4, 4)], None, {"box_transpose_in_kernel": False}),  # wrapper fallback
        ([(40, 40), (20, 20)], jnp.array([1.0, 0.0], jnp.float32),
         {"spatial_tile": 256, "parallel_chunks": 2}),              # multi-tile + ragged
    ]

    for level_hw, has_box, extra in cases:
        key, sub = jax.random.split(key)
        co, bo, ct, bt = make_inputs(sub, level_hw)

        total, cls_l, box_l = detection_loss(
            co, bo, ct, bt, num_positives, has_box, **extra, **config)
        total = jax.block_until_ready(total)

        ref_total, ref_cls, ref_box = _ref_detection_loss(
            co, bo, ct, bt, num_positives, has_box, **config)

        np.testing.assert_allclose(np.asarray(cls_l), np.asarray(ref_cls),
                                   rtol=5e-4, atol=1e-4)
        np.testing.assert_allclose(np.asarray(box_l), np.asarray(ref_box),
                                   rtol=5e-4, atol=1e-4)
        np.testing.assert_allclose(np.asarray(total), np.asarray(ref_total),
                                   rtol=5e-4, atol=1e-3)

    print("KERNEL_OK")
</pallas_src>

<mosaic_0001>
module attributes {stable_mosaic.version = 11 : i64} {
  func.func @_level_kernel(%arg0: i32, %arg1: i32, %arg2: i32, %arg3: memref<1x9x4x64xf32, #tpu.memory_space<vmem>>, %arg4: memref<1x9x1x64xi8, #tpu.memory_space<vmem>>, %arg5: memref<1x36x64xf32, #tpu.memory_space<vmem>>, %arg6: memref<1x36x64xf32, #tpu.memory_space<vmem>>, %arg7: memref<1x1x1x64xf32, #tpu.memory_space<vmem>>, %arg8: memref<1x1x1x64xf32, #tpu.memory_space<vmem>>) attributes {dimension_semantics = [#tpu.dimension_semantics<parallel>, #tpu.dimension_semantics<parallel>, #tpu.dimension_semantics<arbitrary>], iteration_bounds = array<i64: 2, 1, 1>, scalar_prefetch = 0 : i64, scratch_operands = 0 : i64, tpu.core_type = #tpu.core_type<tc>, window_params = [{transform_indices = @transform_0, window_bounds = array<i64: 1, 9, 4, 64>}, {transform_indices = @transform_1, window_bounds = array<i64: 1, 9, 1, 64>}, {transform_indices = @transform_2, window_bounds = array<i64: 1, 36, 64>}, {transform_indices = @transform_3, window_bounds = array<i64: 1, 36, 64>}, {transform_indices = @transform_4, window_bounds = array<i64: 1, 1, 1, 64>}, {transform_indices = @transform_5, window_bounds = array<i64: 1, 1, 1, 64>}]} {
    %c0_i32 = arith.constant 0 : i32
    %0 = arith.cmpi eq, %arg2, %c0_i32 : i32
    %1 = arith.extui %0 : i1 to i32
    %c0_i32_0 = arith.constant 0 : i32
    %2 = arith.cmpi ne, %1, %c0_i32_0 : i32
    scf.if %2 {
      %cst_30 = arith.constant 0.000000e+00 : f32
      %36 = vector.broadcast %cst_30 : f32 to vector<1x1x1x64xf32>
      %c0_31 = arith.constant 0 : index
      %c0_32 = arith.constant 0 : index
      %c0_33 = arith.constant 0 : index
      %c0_34 = arith.constant 0 : index
      %37 = vector.load %arg7[%c0_31, %c0_32, %c0_33, %c0_34] : memref<1x1x1x64xf32, #tpu.memory_space<vmem>>, vector<1x1x1x64xf32>
      tpu.vector_store %arg7[%c0_31, %c0_32, %c0_33, %c0_34], %36 {strides = array<i32>} : memref<1x1x1x64xf32, #tpu.memory_space<vmem>>, vector<1x1x1x64xf32>,
      %cst_35 = arith.constant 0.000000e+00 : f32
      %38 = vector.broadcast %cst_35 : f32 to vector<1x1x1x64xf32>
      %c0_36 = arith.constant 0 : index
      %c0_37 = arith.constant 0 : index
      %c0_38 = arith.constant 0 : index
      %c0_39 = arith.constant 0 : index
      %39 = vector.load %arg8[%c0_36, %c0_37, %c0_38, %c0_39] : memref<1x1x1x64xf32, #tpu.memory_space<vmem>>, vector<1x1x1x64xf32>
      tpu.vector_store %arg8[%c0_36, %c0_37, %c0_38, %c0_39], %38 {strides = array<i32>} : memref<1x1x1x64xf32, #tpu.memory_space<vmem>>, vector<1x1x1x64xf32>,
    } else {
    }
    %3 = tpu.iota {dimensions = array<i32: 0>} : vector<4x1xi32>
    %cst = arith.constant 0.000000e+00 : f32
    %4 = vector.broadcast %cst : f32 to vector<1x64xf32>
    %c0_i32_1 = arith.constant 0 : i32
    %c9_i32 = arith.constant 9 : i32
    %5 = arith.addi %c0_i32_1, %c9_i32 : i32
    %c1_i32 = arith.constant 1 : i32
    %6 = scf.for %arg9 = %c0_i32_1 to %5 step %c1_i32 iter_args(%arg10 = %4) -> (vector<1x64xf32>)  : i32 {
      %c0_30 = arith.constant 0 : index
      %36 = arith.index_cast %arg9 : i32 to index
      %c0_31 = arith.constant 0 : index
      %c0_32 = arith.constant 0 : index
      %37 = vector.load %arg3[%c0_30, %36, %c0_31, %c0_32] : memref<1x9x4x64xf32, #tpu.memory_space<vmem>>, vector<1x1x4x64xf32>
      %38 = vector.shape_cast %37 : vector<1x1x4x64xf32> to vector<1x4x64xf32>
      %39 = vector.shape_cast %38 : vector<1x4x64xf32> to vector<4x64xf32>
      %c0_33 = arith.constant 0 : index
      %40 = arith.index_cast %arg9 : i32 to index
      %c0_34 = arith.constant 0 : index
      %c0_35 = arith.constant 0 : index
      %41 = vector.load %arg4[%c0_33, %40, %c0_34, %c0_35] : memref<1x9x1x64xi8, #tpu.memory_space<vmem>>, vector<1x1x1x64xi8>
      %42 = vector.shape_cast %41 : vector<1x1x1x64xi8> to vector<1x64xi8>
      %43 = arith.extsi %42 : vector<1x64xi8> to vector<1x64xi32>
      %44 = vector.broadcast %43 : vector<1x64xi32> to vector<4x64xi32>
      %45 = vector.broadcast %3 : vector<4x1xi32> to vector<4x64xi32>
      %46 = arith.cmpi eq, %44, %45 : vector<4x64xi32>
      %c0_i32_36 = arith.constant 0 : i32
      %47 = vector.broadcast %c0_i32_36 : i32 to vector<1x64xi32>
      %48 = arith.cmpi sge, %43, %47 : vector<1x64xi32>
      %49 = vector.broadcast %48 : vector<1x64xi1> to vector<4x64xi1>
      %50 = arith.andi %46, %49 : vector<4x64xi1>
      %51 = arith.extui %50 : vector<4x64xi1> to vector<4x64xi32>
      %52 = arith.sitofp %51 : vector<4x64xi32> to vector<4x64xf32>
      %c-2_i32 = arith.constant -2 : i32
      %53 = vector.broadcast %c-2_i32 : i32 to vector<1x64xi32>
      %54 = arith.cmpi ne, %43, %53 : vector<1x64xi32>
      %55 = arith.extui %54 : vector<1x64xi1> to vector<1x64xi32>
      %56 = arith.sitofp %55 : vector<1x64xi32> to vector<1x64xf32>
      %cst_37 = arith.constant 7.500000e-01 : f32
      %57 = vector.broadcast %cst_37 : f32 to vector<1x64xf32>
      %58 = arith.mulf %57, %56 : vector<1x64xf32>
      %cst_38 = arith.constant -5.000000e-01 : f32
      %59 = vector.broadcast %cst_38 : f32 to vector<4x64xf32>
      %60 = arith.mulf %59, %52 : vector<4x64xf32>
      %61 = vector.broadcast %58 : vector<1x64xf32> to vector<4x64xf32>
      %62 = arith.addf %61, %60 : vector<4x64xf32>
      %63 = math.absf %39 : vector<4x64xf32>
      %cst_39 = arith.constant 0.000000e+00 : f32
      %64 = vector.broadcast %cst_39 : f32 to vector<4x64xf32>
      %65 = arith.subf %64, %63 : vector<4x64xf32>
      %66 = math.exp %65 : vector<4x64xf32>
      %67 = math.log1p %66 : vector<4x64xf32>
      %cst_40 = arith.constant 0.000000e+00 : f32
      %68 = vector.broadcast %cst_40 : f32 to vector<4x64xf32>
      %69 = arith.subf %68, %39 : vector<4x64xf32>
      %cst_41 = arith.constant 0.000000e+00 : f32
      %70 = vector.broadcast %cst_41 : f32 to vector<4x64xf32>
      %71 = arith.maximumf %69, %70 : vector<4x64xf32>
      %72 = arith.mulf %39, %52 : vector<4x64xf32>
      %cst_42 = arith.constant 0.000000e+00 : f32
      %73 = vector.broadcast %cst_42 : f32 to vector<4x64xf32>
      %74 = arith.maximumf %39, %73 : vector<4x64xf32>
      %75 = arith.subf %74, %72 : vector<4x64xf32>
      %76 = arith.addf %75, %67 : vector<4x64xf32>
      %cst_43 = arith.constant 0.000000e+00 : f32
      %77 = vector.broadcast %cst_43 : f32 to vector<4x64xf32>
      %78 = arith.subf %77, %72 : vector<4x64xf32>
      %79 = arith.subf %78, %67 : vector<4x64xf32>
      %80 = arith.subf %79, %71 : vector<4x64xf32>
      %cst_44 = arith.constant 2.000000e+00 : f32
      %81 = vector.broadcast %cst_44 : f32 to vector<4x64xf32>
      %82 = arith.mulf %81, %80 : vector<4x64xf32>
      %83 = math.exp %82 : vector<4x64xf32>
      %84 = arith.mulf %83, %76 : vector<4x64xf32>
      %85 = arith.mulf %84, %62 : vector<4x64xf32>
      %cst_45 = arith.constant dense<0.000000e+00> : vector<64xf32>
      %86 = vector.multi_reduction <add>, %85, %cst_45 [0] : vector<4x64xf32> to vector<64xf32>
      %87 = vector.shape_cast %86 : vector<64xf32> to vector<1x64xf32>
      %88 = arith.addf %arg10, %87 : vector<1x64xf32>
      scf.yield %88 : vector<1x64xf32>
    }
    %c9_i32_2 = arith.constant 9 : i32
    %c0 = arith.constant 0 : index
    %c0_3 = arith.constant 0 : index
    %c0_4 = arith.constant 0 : index
    %7 = vector.load %arg5[%c0, %c0_3, %c0_4] : memref<1x36x64xf32, #tpu.memory_space<vmem>>, vector<1x36x64xf32>
    %8 = vector.shape_cast %7 : vector<1x36x64xf32> to vector<36x64xf32>
    %c0_5 = arith.constant 0 : index
    %c0_6 = arith.constant 0 : index
    %c0_7 = arith.constant 0 : index
    %9 = vector.load %arg6[%c0_5, %c0_6, %c0_7] : memref<1x36x64xf32, #tpu.memory_space<vmem>>, vector<1x36x64xf32>
    %10 = vector.shape_cast %9 : vector<1x36x64xf32> to vector<36x64xf32>
    %11 = arith.subf %10, %8 : vector<36x64xf32>
    %12 = math.absf %11 : vector<36x64xf32>
    %cst_8 = arith.constant 1.000000e-01 : f32
    %13 = vector.broadcast %cst_8 : f32 to vector<36x64xf32>
    %14 = arith.minimumf %12, %13 : vector<36x64xf32>
    %15 = arith.subf %12, %14 : vector<36x64xf32>
    %cst_9 = arith.constant 5.000000e-01 : f32
    %16 = vector.broadcast %cst_9 : f32 to vector<36x64xf32>
    %17 = arith.mulf %16, %14 : vector<36x64xf32>
    %18 = arith.mulf %17, %14 : vector<36x64xf32>
    %cst_10 = arith.constant 1.000000e-01 : f32
    %19 = vector.broadcast %cst_10 : f32 to vector<36x64xf32>
    %20 = arith.mulf %19, %15 : vector<36x64xf32>
    %21 = arith.addf %18, %20 : vector<36x64xf32>
    %cst_11 = arith.constant 0.000000e+00 : f32
    %22 = vector.broadcast %cst_11 : f32 to vector<36x64xf32>
    %23 = arith.cmpf one, %10, %22 : vector<36x64xf32>
    %cst_12 = arith.constant 0.000000e+00 : f32
    %24 = vector.broadcast %cst_12 : f32 to vector<36x64xf32>
    %25 = arith.select %23, %21, %24 : vector<36x64xi1>, vector<36x64xf32>
    %cst_13 = arith.constant dense<0.000000e+00> : vector<64xf32>
    %26 = vector.multi_reduction <add>, %25, %cst_13 [0] : vector<36x64xf32> to vector<64xf32>
    %27 = vector.shape_cast %26 : vector<64xf32> to vector<1x64xf32>
    %c0_14 = arith.constant 0 : index
    %c0_15 = arith.constant 0 : index
    %c0_16 = arith.constant 0 : index
    %c0_17 = arith.constant 0 : index
    %28 = vector.load %arg7[%c0_14, %c0_15, %c0_16, %c0_17] : memref<1x1x1x64xf32, #tpu.memory_space<vmem>>, vector<1x1x1x64xf32>
    %29 = vector.shape_cast %6 : vector<1x64xf32> to vector<1x1x1x64xf32>
    %30 = arith.addf %28, %29 : vector<1x1x1x64xf32>
    %c0_18 = arith.constant 0 : index
    %c0_19 = arith.constant 0 : index
    %c0_20 = arith.constant 0 : index
    %c0_21 = arith.constant 0 : index
    %31 = vector.load %arg7[%c0_18, %c0_19, %c0_20, %c0_21] : memref<1x1x1x64xf32, #tpu.memory_space<vmem>>, vector<1x1x1x64xf32>
    tpu.vector_store %arg7[%c0_18, %c0_19, %c0_20, %c0_21], %30 {strides = array<i32>} : memref<1x1x1x64xf32, #tpu.memory_space<vmem>>, vector<1x1x1x64xf32>,
    %c0_22 = arith.constant 0 : index
    %c0_23 = arith.constant 0 : index
    %c0_24 = arith.constant 0 : index
    %c0_25 = arith.constant 0 : index
    %32 = vector.load %arg8[%c0_22, %c0_23, %c0_24, %c0_25] : memref<1x1x1x64xf32, #tpu.memory_space<vmem>>, vector<1x1x1x64xf32>
    %33 = vector.shape_cast %27 : vector<1x64xf32> to vector<1x1x1x64xf32>
    %34 = arith.addf %32, %33 : vector<1x1x1x64xf32>
    %c0_26 = arith.constant 0 : index
    %c0_27 = arith.constant 0 : index
    %c0_28 = arith.constant 0 : index
    %c0_29 = arith.constant 0 : index
    %35 = vector.load %arg8[%c0_26, %c0_27, %c0_28, %c0_29] : memref<1x1x1x64xf32, #tpu.memory_space<vmem>>, vector<1x1x1x64xf32>
    tpu.vector_store %arg8[%c0_26, %c0_27, %c0_28, %c0_29], %34 {strides = array<i32>} : memref<1x1x1x64xf32, #tpu.memory_space<vmem>>, vector<1x1x1x64xf32>,
    return
  }
  func.func @transform_0(%arg0: i32, %arg1: i32, %arg2: i32) -> (i32, i32, i32, i32) {
    %c1_i32 = arith.constant 1 : i32
    %0 = arith.muli %arg1, %c1_i32 : i32
    %1 = arith.addi %0, %arg2 : i32
    %c0_i32 = arith.constant 0 : i32
    %2 = arith.minsi %1, %c0_i32 : i32
    %c0_i32_0 = arith.constant 0 : i32
    %c0_i32_1 = arith.constant 0 : i32
    %c0_i32_2 = arith.constant 0 : i32
    return %arg0, %c0_i32_0, %c0_i32_1, %2 : i32, i32, i32, i32
  }
  func.func @transform_1(%arg0: i32, %arg1: i32, %arg2: i32) -> (i32, i32, i32, i32) {
    %c1_i32 = arith.constant 1 : i32
    %0 = arith.muli %arg1, %c1_i32 : i32
    %1 = arith.addi %0, %arg2 : i32
    %c0_i32 = arith.constant 0 : i32
    %2 = arith.minsi %1, %c0_i32 : i32
    %c0_i32_0 = arith.constant 0 : i32
    %c0_i32_1 = arith.constant 0 : i32
    %c0_i32_2 = arith.constant 0 : i32
    return %arg0, %c0_i32_0, %c0_i32_1, %2 : i32, i32, i32, i32
  }
  func.func @transform_2(%arg0: i32, %arg1: i32, %arg2: i32) -> (i32, i32, i32) {
    %c1_i32 = arith.constant 1 : i32
    %0 = arith.muli %arg1, %c1_i32 : i32
    %1 = arith.addi %0, %arg2 : i32
    %c0_i32 = arith.constant 0 : i32
    %2 = arith.minsi %1, %c0_i32 : i32
    %c0_i32_0 = arith.constant 0 : i32
    %c0_i32_1 = arith.constant 0 : i32
    return %arg0, %c0_i32_0, %2 : i32, i32, i32
  }
  func.func @transform_3(%arg0: i32, %arg1: i32, %arg2: i32) -> (i32, i32, i32) {
    %c1_i32 = arith.constant 1 : i32
    %0 = arith.muli %arg1, %c1_i32 : i32
    %1 = arith.addi %0, %arg2 : i32
    %c0_i32 = arith.constant 0 : i32
    %2 = arith.minsi %1, %c0_i32 : i32
    %c0_i32_0 = arith.constant 0 : i32
    %c0_i32_1 = arith.constant 0 : i32
    return %arg0, %c0_i32_0, %2 : i32, i32, i32
  }
  func.func @transform_4(%arg0: i32, %arg1: i32, %arg2: i32) -> (i32, i32, i32, i32) {
    %c0_i32 = arith.constant 0 : i32
    %c0_i32_0 = arith.constant 0 : i32
    %c0_i32_1 = arith.constant 0 : i32
    return %arg0, %arg1, %c0_i32, %c0_i32_0 : i32, i32, i32, i32
  }
  func.func @transform_5(%arg0: i32, %arg1: i32, %arg2: i32) -> (i32, i32, i32, i32) {
    %c0_i32 = arith.constant 0 : i32
    %c0_i32_0 = arith.constant 0 : i32
    %c0_i32_1 = arith.constant 0 : i32
    return %arg0, %arg1, %c0_i32, %c0_i32_0 : i32, i32, i32, i32
  }
}

</mosaic_0001>

<llo_original>
// kernel: tpu_custom_call.1
$region0: #{tpu_custom_call.1}
  #allocation0 [shape = 'u32[]', space=smem, size = 0x4, offset = 0x4, fixed_abs, tag = 'smem constant byte address 0x4 - core index']
  #allocation1 [shape = 'u32[144,128]{1,0:T(1,128)}', space=vmem, size = 0x12000, scoped, tag = 'internal scratch']
  %s0 = inlined_call_operand.vmem [shape: f32[2,9,4,64], index: 0, kind: input, shape index: {}]
  %s1 = inlined_call_operand.vmem [shape: s8[2,9,1,64], index: 1, kind: input, shape index: {}]
  %s2 = inlined_call_operand.vmem [shape: f32[2,36,64], index: 2, kind: input, shape index: {}]
  %s3 = inlined_call_operand.vmem [shape: f32[2,36,64], index: 3, kind: input, shape index: {}]
  %s4 = inlined_call_operand.hbm [shape: f32[2,1,1,64], index: 4, kind: output, shape index: {0}]
  %s5 = inlined_call_operand.hbm [shape: f32[2,1,1,64], index: 5, kind: output, shape index: {1}]
  %6 = xla_tuple %s4, %s5
  %s7 = sld [smem:[#allocation0]]
  $region68: #{tpu_custom_call.1} parent=0
    _
  %s9 = ssub.s32 1, %s7
  %s10 = scalar_select 0, %s9, %s7
  $region1: #{tpu_custom_call.1} parent=0
    #allocation2 [shape = 'u8[1024]{0}', space=vmem, size = 0x400, scoped, tag = 'output window, operand 0']
    #allocation3 [shape = 's32[2]{0}', space=sflag, size = 0x8, scoped, tag = 'scoped memory for tpu_custom_call.1']
    #allocation4 [shape = 'u8[1024]{0}', space=vmem, size = 0x400, scoped, tag = 'output window, operand 1']
    #allocation5 [shape = 's32[2]{0}', space=sflag, size = 0x8, scoped, tag = 'scoped memory for tpu_custom_call.1']
    %11 = vsyncpa [#allocation3], 0
    %s12 = scalar_lea.sflag [#allocation3], 1
    %13 = vsyncpa %s12, 0
    %14 = vsyncpa [#allocation5], 0
    %s15 = scalar_lea.sflag [#allocation5], 1
    %16 = vsyncpa %s15, 0
    loop: start=0, step=1, limit=4
    $region2: #{tpu_custom_call.1} parent=1 // loop_pre_header
      _
    $region3: #{tpu_custom_call.1} parent=1 // loop_header
      %s18 = sphi 0, %s22
      %p19 = scmp.ge.s32.totalorder %s18, 4
      %s25 = sphi 0, %s44
      %s26 = sphi 0, %s40
      %s27 = sphi 0, %s36
      %s28 = sphi 0, %s25
      %s29 = sphi 0, %s26
      %s30 = sphi 0, %s27
      %s31 = sphi 0, %s28
      %s32 = sphi 0, %s29
      %s33 = sphi 0, %s30
      %s55 = sphi 0, %s57
      %s58 = sphi 0, %s55
      %s59 = sphi 0, %s58
      %s75 = sphi 0, %s59
      %s89 = sphi 0, %s91
      %s92 = sphi 0, %s89
      %s93 = sphi 0, %s92
      %s109 = sphi 0, %s93
      %s123 = sphi 0, %s125
      %s126 = sphi 0, %s123
      %s127 = sphi 0, %s126
      %s143 = sphi 0, %s127
      %s157 = sphi 0, %s159
      %s160 = sphi 0, %s157
      %s161 = sphi 0, %s160
      %s177 = sphi 0, %s161
      %s185 = sphi 0, %s187
      %s188 = sphi 0, %s185
      %s189 = sphi 0, %s188
      %s205 = sphi 0, %s189
      %s213 = sphi 0, %s215
      %s216 = sphi 0, %s213
      %s217 = sphi 0, %s216
      %s233 = sphi 0, %s217
    $region4: #{tpu_custom_call.1} parent=1 // loop_header_branch
      %21 = sbr.rel (%p19) target = $region8
    $region5: #{tpu_custom_call.1} parent=1 // loop_body
      %s23 = ssub.s32 %s18, 1
      %s24 = ssub.s32 %s18, 2
      %s34 = sadd.s32 1, %s27
      %p35 = scmp.ge.s32.totalorder %s34, 1
      %s36 = scalar_select %p35, 0, %s34
      %s37 = sadd.s32 1, %s26
      %s38 = scalar_select %p35, %s37, %s26
      %p39 = scmp.ge.s32.totalorder %s38, 1
      %s40 = scalar_select %p39, 0, %s38
      %s41 = sadd.s32 1, %s25
      %s42 = scalar_select %p39, %s41, %s25
      %p43 = scmp.ge.s32.totalorder %s42, 2
      %s44 = scalar_select %p43, 0, %s42
      %s45 = sadd.s32 %s26, %s27
      %p46 = scmp.lt.s32.totalorder %s45, 0
      %s47 = scalar_select %p46, %s45, 0
      %s48 = sadd.s32 %s40, %s36
      %p49 = scmp.lt.s32.totalorder %s48, 0
      %s50 = scalar_select %p49, %s48, 0
      %s51 = ssub.s32 %s25, %s44
      %s52 = ssub.s32 %s47, %s50
      %s53 = sor.u32 %s51, %s52
      %p54 = scmp.eq.s32.totalorder %s53, 0
      %s56 = sadd.s32 %s55, 1
      %s57 = scalar_select %p54, %s55, %s56
      %p60 = pneg %p54
      %p61 = scmp.eq.s32.totalorder %s18, 1
      %p62 = por %p60, %p61
      %p63 = scmp.ne.s32.totalorder %s55, %s58
      %p64 = scmp.eq.s32.totalorder %s18, 0
      %p65 = por %p63, %p64
      %p66 = scmp.ne.s32.totalorder %s55, %s58
      %p67 = scmp.eq.s32.totalorder %s23, 1
      %p68 = por %p66, %p67
      %p69 = scmp.ne.s32.totalorder %s58, %s59
      %p70 = scmp.eq.s32.totalorder %s23, 0
      %p71 = por %p69, %p70
      %p72 = scmp.ne.s32.totalorder %s58, %s59
      %p73 = scmp.eq.s32.totalorder %s24, 1
      %p74 = por %p72, %p73
      %p76 = scmp.ne.s32.totalorder %s59, %s75
      %p77 = scmp.eq.s32.totalorder %s24, 0
      %p78 = por %p76, %p77
      %s79 = sadd.s32 %s26, %s27
      %p80 = scmp.lt.s32.totalorder %s79, 0
      %s81 = scalar_select %p80, %s79, 0
      %s82 = sadd.s32 %s40, %s36
      %p83 = scmp.lt.s32.totalorder %s82, 0
      %s84 = scalar_select %p83, %s82, 0
      %s85 = ssub.s32 %s25, %s44
      %s86 = ssub.s32 %s81, %s84
      %s87 = sor.u32 %s85, %s86
      %p88 = scmp.eq.s32.totalorder %s87, 0
      %s90 = sadd.s32 %s89, 1
      %s91 = scalar_select %p88, %s89, %s90
      %p94 = pneg %p88
      %p95 = scmp.eq.s32.totalorder %s18, 1
      %p96 = por %p94, %p95
      %p97 = scmp.ne.s32.totalorder %s89, %s92
      %p98 = scmp.eq.s32.totalorder %s18, 0
      %p99 = por %p97, %p98
      %p100 = scmp.ne.s32.totalorder %s89, %s92
      %p101 = scmp.eq.s32.totalorder %s23, 1
      %p102 = por %p100, %p101
      %p103 = scmp.ne.s32.totalorder %s92, %s93
      %p104 = scmp.eq.s32.totalorder %s23, 0
      %p105 = por %p103, %p104
      %p106 = scmp.ne.s32.totalorder %s92, %s93
      %p107 = scmp.eq.s32.totalorder %s24, 1
      %p108 = por %p106, %p107
      %p110 = scmp.ne.s32.totalorder %s93, %s109
      %p111 = scmp.eq.s32.totalorder %s24, 0
      %p112 = por %p110, %p111
      %s113 = sadd.s32 %s26, %s27
      %p114 = scmp.lt.s32.totalorder %s113, 0
      %s115 = scalar_select %p114, %s113, 0
      %s116 = sadd.s32 %s40, %s36
      %p117 = scmp.lt.s32.totalorder %s116, 0
      %s118 = scalar_select %p117, %s116, 0
      %s119 = ssub.s32 %s25, %s44
      %s120 = ssub.s32 %s115, %s118
      %s121 = sor.u32 %s119, %s120
      %p122 = scmp.eq.s32.totalorder %s121, 0
      %s124 = sadd.s32 %s123, 1
      %s125 = scalar_select %p122, %s123, %s124
      %p128 = pneg %p122
      %p129 = scmp.eq.s32.totalorder %s18, 1
      %p130 = por %p128, %p129
      %p131 = scmp.ne.s32.totalorder %s123, %s126
      %p132 = scmp.eq.s32.totalorder %s18, 0
      %p133 = por %p131, %p132
      %p134 = scmp.ne.s32.totalorder %s123, %s126
      %p135 = scmp.eq.s32.totalorder %s23, 1
      %p136 = por %p134, %p135
      %p137 = scmp.ne.s32.totalorder %s126, %s127
      %p138 = scmp.eq.s32.totalorder %s23, 0
      %p139 = por %p137, %p138
      %p140 = scmp.ne.s32.totalorder %s126, %s127
      %p141 = scmp.eq.s32.totalorder %s24, 1
      %p142 = por %p140, %p141
      %p144 = scmp.ne.s32.totalorder %s127, %s143
      %p145 = scmp.eq.s32.totalorder %s24, 0
      %p146 = por %p144, %p145
      %s147 = sadd.s32 %s26, %s27
      %p148 = scmp.lt.s32.totalorder %s147, 0
      %s149 = scalar_select %p148, %s147, 0
      %s150 = sadd.s32 %s40, %s36
      %p151 = scmp.lt.s32.totalorder %s150, 0
      %s152 = scalar_select %p151, %s150, 0
      %s153 = ssub.s32 %s25, %s44
      %s154 = ssub.s32 %s149, %s152
      %s155 = sor.u32 %s153, %s154
      %p156 = scmp.eq.s32.totalorder %s155, 0
      %s158 = sadd.s32 %s157, 1
      %s159 = scalar_select %p156, %s157, %s158
      %p162 = pneg %p156
      %p163 = scmp.eq.s32.totalorder %s18, 1
      %p164 = por %p162, %p163
      %p165 = scmp.ne.s32.totalorder %s157, %s160
      %p166 = scmp.eq.s32.totalorder %s18, 0
      %p167 = por %p165, %p166
      %p168 = scmp.ne.s32.totalorder %s157, %s160
      %p169 = scmp.eq.s32.totalorder %s23, 1
      %p170 = por %p168, %p169
      %p171 = scmp.ne.s32.totalorder %s160, %s161
      %p172 = scmp.eq.s32.totalorder %s23, 0
      %p173 = por %p171, %p172
      %p174 = scmp.ne.s32.totalorder %s160, %s161
      %p175 = scmp.eq.s32.totalorder %s24, 1
      %p176 = por %p174, %p175
      %p178 = scmp.ne.s32.totalorder %s161, %s177
      %p179 = scmp.eq.s32.totalorder %s24, 0
      %p180 = por %p178, %p179
      %s181 = ssub.s32 %s25, %s44
      %s182 = ssub.s32 %s26, %s40
      %s183 = sor.u32 %s181, %s182
      %p184 = scmp.eq.s32.totalorder %s183, 0
      %s186 = sadd.s32 %s185, 1
      %s187 = scalar_select %p184, %s185, %s186
      %p190 = pneg %p184
      %p191 = scmp.eq.s32.totalorder %s18, 1
      %p192 = por %p190, %p191
      %p193 = scmp.ne.s32.totalorder %s185, %s188
      %p194 = scmp.eq.s32.totalorder %s18, 0
      %p195 = por %p193, %p194
      %p196 = scmp.ne.s32.totalorder %s185, %s188
      %p197 = scmp.eq.s32.totalorder %s23, 1
      %p198 = por %p196, %p197
      %p199 = scmp.ne.s32.totalorder %s188, %s189
      %p200 = scmp.eq.s32.totalorder %s23, 0
      %p201 = por %p199, %p200
      %p202 = scmp.ne.s32.totalorder %s188, %s189
      %p203 = scmp.eq.s32.totalorder %s24, 1
      %p204 = por %p202, %p203
      %p206 = scmp.ne.s32.totalorder %s189, %s205
      %p207 = scmp.eq.s32.totalorder %s24, 0
      %p208 = por %p206, %p207
      %s209 = ssub.s32 %s25, %s44
      %s210 = ssub.s32 %s26, %s40
      %s211 = sor.u32 %s209, %s210
      %p212 = scmp.eq.s32.totalorder %s211, 0
      %s214 = sadd.s32 %s213, 1
      %s215 = scalar_select %p212, %s213, %s214
      %p218 = pneg %p212
      %p219 = scmp.eq.s32.totalorder %s18, 1
      %p220 = por %p218, %p219
      %p221 = scmp.ne.s32.totalorder %s213, %s216
      %p222 = scmp.eq.s32.totalorder %s18, 0
      %p223 = por %p221, %p222
      %p224 = scmp.ne.s32.totalorder %s213, %s216
      %p225 = scmp.eq.s32.totalorder %s23, 1
      %p226 = por %p224, %p225
      %p227 = scmp.ne.s32.totalorder %s216, %s217
      %p228 = scmp.eq.s32.totalorder %s23, 0
      %p229 = por %p227, %p228
      %p230 = scmp.ne.s32.totalorder %s216, %s217
      %p231 = scmp.eq.s32.totalorder %s24, 1
      %p232 = por %p230, %p231
      %p234 = scmp.ne.s32.totalorder %s217, %s233
      %p235 = scmp.eq.s32.totalorder %s24, 0
      %p236 = por %p234, %p235
      %p237 = scmp.le.s32.totalorder 1, %s18
      %p238 = scmp.lt.s32.totalorder %s18, 3
      %p239 = pnand %p237, %p238
      %p240 = pneg %p239
      // Predicated region
      $region9: #{tpu_custom_call.1} parent=5 // pred_check
        _
      $region10: #{tpu_custom_call.1} parent=5 // pred_check_branch
        %242 = sbr.rel (%p239) target = $region12
      $region11: #{tpu_custom_call.1} parent=5 // pred_region
        %s243 = ssub.s32 %s18, 1
      $region12: #{tpu_custom_call.1} parent=5 // pred_fallthru
        _
      %p244 = scmp.lt.s32.totalorder %s18, 2
      // Predicated region
      $region13: #{tpu_custom_call.1} parent=5 // pred_check
        %p245 = pneg %p244
      $region14: #{tpu_custom_call.1} parent=5 // pred_check_branch
        %247 = sbr.rel (%p245) target = $region16
      $region15: #{tpu_custom_call.1} parent=5 // pred_region
        // Predicated region
        $region17: #{tpu_custom_call.1} parent=15 // pred_check
          %p248 = pneg %p65
        $region18: #{tpu_custom_call.1} parent=15 // pred_check_branch
          %250 = sbr.rel (%p248) target = $region20
        $region19: #{tpu_custom_call.1} parent=15 // pred_region
          %s251 = sadd.s32 %s26, %s27
          %p252 = scmp.lt.s32.totalorder %s251, 0
          %s253 = scalar_select %p252, %s251, 0
          %p254 = scmp.lt.s32.totalorder %s25, 1
          %s255 = scalar_select %p254, %s25, 1
          %p256 = scmp.lt.s32.totalorder %s253, 0
          %s257 = scalar_select %p256, %s253, 0
          %s258 = smul.addr %s255, 9
          %s259 = sadd.s32 %s257, %s258
          %s260 = smul.addr %s259, 4
          %s261 = scalar_lea.vmem %s0, %s260
          %s262 = sadd.s32 %s26, %s27
          %p263 = scmp.lt.s32.totalorder %s262, 0
          %s264 = scalar_select %p263, %s262, 0
        $region20: #{tpu_custom_call.1} parent=15 // pred_fallthru
          _
        // Predicated region
        $region21: #{tpu_custom_call.1} parent=15 // pred_check
          %p265 = pneg %p99
        $region22: #{tpu_custom_call.1} parent=15 // pred_check_branch
          %267 = sbr.rel (%p265) target = $region24
        $region23: #{tpu_custom_call.1} parent=15 // pred_region
          %s268 = sadd.s32 %s26, %s27
          %p269 = scmp.lt.s32.totalorder %s268, 0
          %s270 = scalar_select %p269, %s268, 0
          %p271 = scmp.lt.s32.totalorder %s25, 1
          %s272 = scalar_select %p271, %s25, 1
          %p273 = scmp.lt.s32.totalorder %s270, 0
          %s274 = scalar_select %p273, %s270, 0
          %s275 = smul.addr %s272, 9
          %s276 = sadd.s32 %s274, %s275
          %s277 = scalar_lea.vmem %s1, %s276
          %s278 = sadd.s32 %s26, %s27
          %p279 = scmp.lt.s32.totalorder %s278, 0
          %s280 = scalar_select %p279, %s278, 0
        $region24: #{tpu_custom_call.1} parent=15 // pred_fallthru
          _
        // Predicated region
        $region25: #{tpu_custom_call.1} parent=15 // pred_check
          %p281 = pneg %p133
        $region26: #{tpu_custom_call.1} parent=15 // pred_check_branch
          %283 = sbr.rel (%p281) target = $region28
        $region27: #{tpu_custom_call.1} parent=15 // pred_region
          %s284 = sadd.s32 %s26, %s27
          %p285 = scmp.lt.s32.totalorder %s284, 0
          %s286 = scalar_select %p285, %s284, 0
          %p287 = scmp.lt.s32.totalorder %s25, 1
          %s288 = scalar_select %p287, %s25, 1
          %p289 = scmp.lt.s32.totalorder %s286, 0
          %s290 = scalar_select %p289, %s286, 0
          %s291 = smul.addr %s288, 5
          %s292 = sadd.s32 %s290, %s291
          %s293 = smul.addr %s292, 8
          %s294 = scalar_lea.vmem %s2, %s293
          %s295 = sadd.s32 %s26, %s27
          %p296 = scmp.lt.s32.totalorder %s295, 0
          %s297 = scalar_select %p296, %s295, 0
        $region28: #{tpu_custom_call.1} parent=15 // pred_fallthru
          _
        // Predicated region
        $region29: #{tpu_custom_call.1} parent=15 // pred_check
          %p298 = pneg %p167
        $region30: #{tpu_custom_call.1} parent=15 // pred_check_branch
          %300 = sbr.rel (%p298) target = $region32
        $region31: #{tpu_custom_call.1} parent=15 // pred_region
          %s301 = sadd.s32 %s26, %s27
          %p302 = scmp.lt.s32.totalorder %s301, 0
          %s303 = scalar_select %p302, %s301, 0
          %p304 = scmp.lt.s32.totalorder %s25, 1
          %s305 = scalar_select %p304, %s25, 1
          %p306 = scmp.lt.s32.totalorder %s303, 0
          %s307 = scalar_select %p306, %s303, 0
          %s308 = smul.addr %s305, 5
          %s309 = sadd.s32 %s307, %s308
          %s310 = smul.addr %s309, 8
          %s311 = scalar_lea.vmem %s3, %s310
          %s312 = sadd.s32 %s26, %s27
          %p313 = scmp.lt.s32.totalorder %s312, 0
          %s314 = scalar_select %p313, %s312, 0
        $region32: #{tpu_custom_call.1} parent=15 // pred_fallthru
          _
      $region16: #{tpu_custom_call.1} parent=5 // pred_fallthru
        _
      %p315 = scmp.le.s32.totalorder 1, %s18
      %p316 = scmp.lt.s32.totalorder %s18, 3
      %p317 = pnand %p315, %p316
      %p318 = pneg %p317
      // Predicated region
      $region33: #{tpu_custom_call.1} parent=5 // pred_check
        _
      $region34: #{tpu_custom_call.1} parent=5 // pred_check_branch
        %320 = sbr.rel (%p317) target = $region36
      $region35: #{tpu_custom_call.1} parent=5 // pred_region
        %s321 = ssub.s32 %s18, 1
        %s322 = sadd.s32 %s29, %s30
        %p323 = scmp.lt.s32.totalorder %s322, 0
        %s324 = scalar_select %p323, %s322, 0
        %p325 = scmp.lt.s32.totalorder %s28, 1
        %s326 = scalar_select %p325, %s28, 1
        %p327 = scmp.lt.s32.totalorder %s324, 0
        %s328 = scalar_select %p327, %s324, 0
        %s329 = smul.addr %s326, 9
        %s330 = sadd.s32 %s328, %s329
        %s331 = smul.addr %s330, 4
        %s332 = scalar_lea.vmem %s0, %s331
        %p333 = pneg %p71
        %p334 = pneg %p68
        %s335 = sadd.s32 %s29, %s30
        %p336 = scmp.lt.s32.totalorder %s335, 0
        %s337 = scalar_select %p336, %s335, 0
        %p338 = scmp.lt.s32.totalorder %s28, 1
        %s339 = scalar_select %p338, %s28, 1
        %p340 = scmp.lt.s32.totalorder %s337, 0
        %s341 = scalar_select %p340, %s337, 0
        %s342 = smul.addr %s339, 9
        %s343 = sadd.s32 %s341, %s342
        %s344 = scalar_lea.vmem %s1, %s343
        %p345 = pneg %p105
        %p346 = pneg %p102
        %s347 = sadd.s32 %s29, %s30
        %p348 = scmp.lt.s32.totalorder %s347, 0
        %s349 = scalar_select %p348, %s347, 0
        %p350 = scmp.lt.s32.totalorder %s28, 1
        %s351 = scalar_select %p350, %s28, 1
        %p352 = scmp.lt.s32.totalorder %s349, 0
        %s353 = scalar_select %p352, %s349, 0
        %s354 = smul.addr %s351, 5
        %s355 = sadd.s32 %s353, %s354
        %s356 = smul.addr %s355, 8
        %s357 = scalar_lea.vmem %s2, %s356
        %p358 = pneg %p139
        %p359 = pneg %p136
        %s360 = sadd.s32 %s29, %s30
        %p361 = scmp.lt.s32.totalorder %s360, 0
        %s362 = scalar_select %p361, %s360, 0
        %p363 = scmp.lt.s32.totalorder %s28, 1
        %s364 = scalar_select %p363, %s28, 1
        %p365 = scmp.lt.s32.totalorder %s362, 0
        %s366 = scalar_select %p365, %s362, 0
        %s367 = smul.addr %s364, 5
        %s368 = sadd.s32 %s366, %s367
        %s369 = smul.addr %s368, 8
        %s370 = scalar_lea.vmem %s3, %s369
        %p371 = pneg %p173
        %p372 = pneg %p170
        %p373 = pneg %p201
        %p374 = pneg %p198
        %s375 = sand.u32 %s188, 1
        %s376 = scalar_lea.sflag [#allocation3], %s375
        %s377 = sand.u32 %s188, 1
        %s378 = scalar_lea.vmem [#allocation2], %s377
        %p379 = pneg %p229
        %p380 = pneg %p226
        %s381 = sand.u32 %s216, 1
        %s382 = scalar_lea.sflag [#allocation5], %s381
        %s383 = sand.u32 %s216, 1
        %s384 = scalar_lea.vmem [#allocation4], %s383
        %s385 = sadd.s32 %s29, %s30
        %p386 = scmp.lt.s32.totalorder %s385, 0
        %s387 = scalar_select %p386, %s385, 0
        %p388 = scmp.lt.s32.totalorder %s28, 1
        %s389 = scalar_select %p388, %s28, 1
        %p390 = scmp.lt.s32.totalorder %s387, 0
        %s391 = scalar_select %p390, %s387, 0
        %s392 = smul.addr %s389, 9
        %s393 = sadd.s32 %s391, %s392
        %s394 = smul.addr %s393, 4
        %s395 = scalar_lea.vmem %s0, %s394
        %s396 = sadd.s32 %s29, %s30
        %p397 = scmp.lt.s32.totalorder %s396, 0
        %s398 = scalar_select %p397, %s396, 0
        %s399 = sadd.s32 %s29, %s30
        %p400 = scmp.lt.s32.totalorder %s399, 0
        %s401 = scalar_select %p400, %s399, 0
        %p402 = scmp.lt.s32.totalorder %s28, 1
        %s403 = scalar_select %p402, %s28, 1
        %p404 = scmp.lt.s32.totalorder %s401, 0
        %s405 = scalar_select %p404, %s401, 0
        %s406 = smul.addr %s403, 9
        %s407 = sadd.s32 %s405, %s406
        %s408 = scalar_lea.vmem %s1, %s407
        %s409 = sadd.s32 %s29, %s30
        %p410 = scmp.lt.s32.totalorder %s409, 0
        %s411 = scalar_select %p410, %s409, 0
        %s412 = sadd.s32 %s29, %s30
        %p413 = scmp.lt.s32.totalorder %s412, 0
        %s414 = scalar_select %p413, %s412, 0
        %p415 = scmp.lt.s32.totalorder %s28, 1
        %s416 = scalar_select %p415, %s28, 1
        %p417 = scmp.lt.s32.totalorder %s414, 0
        %s418 = scalar_select %p417, %s414, 0
        %s419 = smul.addr %s416, 5
        %s420 = sadd.s32 %s418, %s419
        %s421 = smul.addr %s420, 8
        %s422 = scalar_lea.vmem %s2, %s421
        %s423 = sadd.s32 %s29, %s30
        %p424 = scmp.lt.s32.totalorder %s423, 0
        %s425 = scalar_select %p424, %s423, 0
        %s426 = sadd.s32 %s29, %s30
        %p427 = scmp.lt.s32.totalorder %s426, 0
        %s428 = scalar_select %p427, %s426, 0
        %p429 = scmp.lt.s32.totalorder %s28, 1
        %s430 = scalar_select %p429, %s28, 1
        %p431 = scmp.lt.s32.totalorder %s428, 0
        %s432 = scalar_select %p431, %s428, 0
        %s433 = smul.addr %s430, 5
        %s434 = sadd.s32 %s432, %s433
        %s435 = smul.addr %s434, 8
        %s436 = scalar_lea.vmem %s3, %s435
        %s437 = sadd.s32 %s29, %s30
        %p438 = scmp.lt.s32.totalorder %s437, 0
        %s439 = scalar_select %p438, %s437, 0
        %p440 = scmp.eq.s32.totalorder %s30, 0
        // Predicated region
        $region37: #{tpu_custom_call.1} parent=35 // pred_check
          %p441 = pneg %p440
        $region38: #{tpu_custom_call.1} parent=35 // pred_check_branch
          %443 = sbr.rel (%p441) target = $region40
        $region39: #{tpu_custom_call.1} parent=35 // pred_region
          %vm444 = vcmask 516096
          %445 = vst.msk [vmem:[%s378] sm:$0x1] %vm444, 0.0
          %446 = vst.msk [vmem:[%s384] sm:$0x1] %vm444, 0.0
        $region40: #{tpu_custom_call.1} parent=35 // pred_fallthru
          _
        %v447 = vlaneseq
        %v448 = vshrl.u32 %v447, 7
        loop: start=0, step=1, limit=9
        $region41: #{tpu_custom_call.1} parent=35 // loop_pre_header
          _
        $region42: #{tpu_custom_call.1} parent=35 // loop_header
          %s450 = sphi 0, %s454
          %p451 = scmp.ge.s32.totalorder %s450, 9
          %v455 = vphi 0.0, %v522
        $region43: #{tpu_custom_call.1} parent=35 // loop_header_branch
          %453 = sbr.rel (%p451) target = $region47
        $region44: #{tpu_custom_call.1} parent=35 // loop_body
          %s456 = smul.u32 %s450, 4
          %s457 = scalar_lea.vmem %s395, %s456
          %v458 = vld [vmem:[%s457] sm:$0xf]
          %s459 = scalar_lea.vmem %s408, %s450
          %v460 = vld [vmem:[%s459] sm:$0x1]
          %v461 = vunpack.c.0.s8 %v460
          %v462 = vlaneseq
          %v463 = vshrl.u32 %v462, 7
          %v464 = vsub.s32 0, %v463
          %v465 = vrot.slane %v461, %v464
          %vm466 = vcmp.eq.s32.totalorder %v465, %v448
          %vm467 = vcmp.ge.s32.totalorder %v461, 0
          %v468 = vsel %vm467, 1, 0
          %v469 = vlaneseq
          %v470 = vshrl.u32 %v469, 7
          %v471 = vsub.s32 0, %v470
          %v472 = vrot.slane %v468, %v471
          %vm473 = vcmp.eq.s32.totalorder %v472, 1
          %vm474 = vmand %vm466, %vm473
          %v475 = vsel %vm474, 1, 0
          %v476 = vcvt.s32.f32 %v475
          %vm477 = vcmp.ne.s32.totalorder %v461, 4294967294
          %v478 = vsel %vm477, 1, 0
          %v479 = vcvt.s32.f32 %v478
          %v480 = vmul.f32 %v479, 0.75
          %v481 = vmul.f32 %v476, -0.5
          %v482 = vlaneseq
          %v483 = vshrl.u32 %v482, 7
          %v484 = vsub.s32 0, %v483
          %v485 = vrot.slane %v480, %v484
          %v486 = vadd.f32 %v485, %v481
          %v487 = vand.u32 2147483647, %v458
          %v488 = vsub.f32 0.0, %v487
          %v489 = vmul.f32 %v488, 1.442695
          %v490 = vpow.pop %v489
          %v491 = vadd.f32 %v490, 1.0
          %v492 = vlog2.pop %v491
          %v493 = vmul.f32 %v492, 0.6931472
          %v494 = vmul.f32 -0.5, %v490
          %v495 = vadd.f32 %v494, 1.0
          %v496 = vmul.f32 %v495, %v490
          %v497 = vand.u32 2147483647, %v490
          %vm498 = vcmp.lt.f32.partialorder %v497, 0.0004427343
          %v499 = vsel %vm498, %v496, %v493
          %v500 = vsub.f32 0.0, %v458
          %v501 = vmax.f32 %v500, 0.0
          %v502 = vmul.f32 %v458, %v476
          %v503 = vmax.f32 %v458, 0.0
          %v504 = vsub.f32 %v503, %v502
          %v505 = vadd.f32 %v504, %v499
          %v506 = vsub.f32 0.0, %v502
          %v507 = vsub.f32 %v506, %v499
          %v508 = vsub.f32 %v507, %v501
          %v509 = vmul.f32 %v508, 2.0
          %v510 = vmul.f32 %v509, 1.442695
          %v511 = vpow.pop %v510
          %v512 = vmul.f32 %v511, %v505
          %v513 = vmul.f32 %v512, %v486
          %vm514 = vcmask 519168
          %v515 = vsel %vm514, %v513, 0.0
          %v516 = vrot.slane %v515, 4
          %v517 = vadd.f32 %v515, %v516
          %v518 = vrot.slane %v517, 2
          %v519 = vadd.f32 %v517, %v518
          %v520 = vrot.slane %v519, 1
          %v521 = vadd.f32 %v519, %v520
          %v522 = vadd.f32 %v455, %v521
        $region45: #{tpu_custom_call.1} parent=35 // loop_footer
          %s454 = sadd.s32 1, %s450
        $region46: #{tpu_custom_call.1} parent=35 // loop_footer_branch
          %449 = sbr.rel target = $region42
        $region47: #{tpu_custom_call.1} parent=35 // loop_exit
          _
        %v523 = vld [vmem:[%s422] sm:$0xff]
        %v524 = vld [vmem:[%s422 + $0x8] sm:$0xff]
        %v525 = vld [vmem:[%s422 + $0x10] sm:$0xff]
        %v526 = vld [vmem:[%s422 + $0x18] sm:$0xff]
        %v527 = vld [vmem:[%s422 + $0x20] sm:$0xf]
        %v528 = vld [vmem:[%s436] sm:$0xff]
        %v529 = vld [vmem:[%s436 + $0x8] sm:$0xff]
        %v530 = vld [vmem:[%s436 + $0x10] sm:$0xff]
        %v531 = vld [vmem:[%s436 + $0x18] sm:$0xff]
        %v532 = vld [vmem:[%s436 + $0x20] sm:$0xf]
        %v533 = vsub.f32 %v528, %v523
        %v534 = vsub.f32 %v529, %v524
        %v535 = vsub.f32 %v530, %v525
        %v536 = vsub.f32 %v531, %v526
        %v537 = vsub.f32 %v532, %v527
        %v538 = vand.u32 2147483647, %v533
        %v539 = vand.u32 2147483647, %v534
        %v540 = vand.u32 2147483647, %v535
        %v541 = vand.u32 2147483647, %v536
        %v542 = vand.u32 2147483647, %v537
        %v543 = vmin.f32 %v538, 0.1
        %v544 = vmin.f32 %v539, 0.1
        %v545 = vmin.f32 %v540, 0.1
        %v546 = vmin.f32 %v541, 0.1
        %v547 = vmin.f32 %v542, 0.1
        %v548 = vsub.f32 %v538, %v543
        %v549 = vsub.f32 %v539, %v544
        %v550 = vsub.f32 %v540, %v545
        %v551 = vsub.f32 %v541, %v546
        %v552 = vsub.f32 %v542, %v547
        %v553 = vmul.f32 %v543, 0.5
        %v554 = vmul.f32 %v544, 0.5
        %v555 = vmul.f32 %v545, 0.5
        %v556 = vmul.f32 %v546, 0.5
        %v557 = vmul.f32 %v547, 0.5
        %v558 = vmul.f32 %v553, %v543
        %v559 = vmul.f32 %v554, %v544
        %v560 = vmul.f32 %v555, %v545
        %v561 = vmul.f32 %v556, %v546
        %v562 = vmul.f32 %v557, %v547
        %v563 = vmul.f32 %v548, 0.1
        %v564 = vmul.f32 %v549, 0.1
        %v565 = vmul.f32 %v550, 0.1
        %v566 = vmul.f32 %v551, 0.1
        %v567 = vmul.f32 %v552, 0.1
        %v568 = vadd.f32 %v558, %v563
        %v569 = vadd.f32 %v559, %v564
        %v570 = vadd.f32 %v560, %v565
        %v571 = vadd.f32 %v561, %v566
        %v572 = vadd.f32 %v562, %v567
        %vm573 = vcmp.ne.f32.partialorder %v528, 0.0
        %vm574 = vcmp.ne.f32.partialorder %v529, 0.0
        %vm575 = vcmp.ne.f32.partialorder %v530, 0.0
        %vm576 = vcmp.ne.f32.partialorder %v531, 0.0
        %vm577 = vcmp.ne.f32.partialorder %v532, 0.0
        %v578 = vsel %vm573, %v568, 0.0
        %v579 = vsel %vm574, %v569, 0.0
        %v580 = vsel %vm575, %v570, 0.0
        %v581 = vsel %vm576, %v571, 0.0
        %v582 = vsel %vm577, %v572, 0.0
        %vm583 = vcmask 523264
        %v584 = vsel %vm583, %v578, 0.0
        %v585 = vsel %vm583, %v579, 0.0
        %v586 = vadd.f32 %v584, %v585
        %v587 = vsel %vm583, %v580, 0.0
        %v588 = vadd.f32 %v586, %v587
        %v589 = vsel %vm583, %v581, 0.0
        %v590 = vadd.f32 %v588, %v589
        %vm591 = vcmask 519168
        %v592 = vsel %vm591, %v582, 0.0
        %v593 = vadd.f32 %v590, %v592
        %v594 = vrot.slane %v593, 4
        %v595 = vadd.f32 %v593, %v594
        %v596 = vrot.slane %v595, 2
        %v597 = vadd.f32 %v595, %v596
        %v598 = vrot.slane %v597, 1
        %v599 = vadd.f32 %v597, %v598
        %v600 = vld [vmem:[%s378] sm:$0x1]
        %v601 = vadd.f32 %v600, %v455
        %vm602 = vcmask 516096
        %603 = vst.msk [vmem:[%s378] sm:$0x1] %vm602, %v601
        %v604 = vld [vmem:[%s384] sm:$0x1]
        %v605 = vadd.f32 %v604, %v599
        %606 = vst.msk [vmem:[%s384] sm:$0x1] %vm602, %v605
        %s607 = sand.u32 %s188, 1
        %s608 = scalar_lea.sflag [#allocation3], %s607
        %s609 = sand.u32 %s188, 1
        %s610 = scalar_lea.vmem [#allocation2], %s609
        %s611 = sand.u32 %s216, 1
        %s612 = scalar_lea.sflag [#allocation5], %s611
        %s613 = sand.u32 %s216, 1
        %s614 = scalar_lea.vmem [#allocation4], %s613
        // Predicated region
        $region48: #{tpu_custom_call.1} parent=35 // pred_check
          %p615 = pneg %p198
        $region49: #{tpu_custom_call.1} parent=35 // pred_check_branch
          %617 = sbr.rel (%p615) target = $region51
        $region50: #{tpu_custom_call.1} parent=35 // pred_region
          %s619 = ssub.s32 16, 16
          %620 = vsyncadd %s608, %s619
          %s621 = sadd.s32 %s29, %s28
          %s622 = smul.addr %s621, 16
          %s623 = scalar_lea.hbm %s4, %s622
          %s625 = sshll.u32 %s610, 4
          %s626 = int_to_ptr.vmem [resolvable:$true] %s625
          %628 = dma.vmem_to_hbm [thread:$0]  %s626, 16, %s623, %s608
        $region51: #{tpu_custom_call.1} parent=35 // pred_fallthru
          _
        // Predicated region
        $region52: #{tpu_custom_call.1} parent=35 // pred_check
          %p629 = pneg %p226
        $region53: #{tpu_custom_call.1} parent=35 // pred_check_branch
          %631 = sbr.rel (%p629) target = $region55
        $region54: #{tpu_custom_call.1} parent=35 // pred_region
          %s633 = ssub.s32 16, 16
          %634 = vsyncadd %s612, %s633
          %s635 = sadd.s32 %s29, %s28
          %s636 = smul.addr %s635, 16
          %s637 = scalar_lea.hbm %s5, %s636
          %s639 = sshll.u32 %s614, 4
          %s640 = int_to_ptr.vmem [resolvable:$true] %s639
          %642 = dma.vmem_to_hbm [thread:$0]  %s640, 16, %s637, %s612
        $region55: #{tpu_custom_call.1} parent=35 // pred_fallthru
          _
      $region36: #{tpu_custom_call.1} parent=5 // pred_fallthru
        _
      %p643 = scmp.le.s32.totalorder 2, %s18
      // Predicated region
      $region56: #{tpu_custom_call.1} parent=5 // pred_check
        %p644 = pneg %p643
      $region57: #{tpu_custom_call.1} parent=5 // pred_check_branch
        %646 = sbr.rel (%p644) target = $region59
      $region58: #{tpu_custom_call.1} parent=5 // pred_region
        %s647 = ssub.s32 %s18, 2
        // Predicated region
        $region60: #{tpu_custom_call.1} parent=58 // pred_check
          %p648 = pneg %p204
        $region61: #{tpu_custom_call.1} parent=58 // pred_check_branch
          %650 = sbr.rel (%p648) target = $region63
        $region62: #{tpu_custom_call.1} parent=58 // pred_region
          %s651 = sand.u32 %s189, 1
          %s652 = scalar_lea.sflag [#allocation3], %s651
          %s653 = sand.u32 %s189, 1
          %s654 = scalar_lea.vmem [#allocation2], %s653
          %655 = dma.done %s652, 16
        $region63: #{tpu_custom_call.1} parent=58 // pred_fallthru
          _
        // Predicated region
        $region64: #{tpu_custom_call.1} parent=58 // pred_check
          %p656 = pneg %p232
        $region65: #{tpu_custom_call.1} parent=58 // pred_check_branch
          %658 = sbr.rel (%p656) target = $region67
        $region66: #{tpu_custom_call.1} parent=58 // pred_region
          %s659 = sand.u32 %s217, 1
          %s660 = scalar_lea.sflag [#allocation5], %s659
          %s661 = sand.u32 %s217, 1
          %s662 = scalar_lea.vmem [#allocation4], %s661
          %663 = dma.done %s660, 16
        $region67: #{tpu_custom_call.1} parent=58 // pred_fallthru
          _
      $region59: #{tpu_custom_call.1} parent=5 // pred_fallthru
        _
    $region6: #{tpu_custom_call.1} parent=1 // loop_footer
      %s22 = sadd.s32 1, %s18
    $region7: #{tpu_custom_call.1} parent=1 // loop_footer_branch
      %17 = sbr.rel target = $region3
    $region8: #{tpu_custom_call.1} parent=1 // loop_exit
      _
    %664 = vsyncpa [#allocation3], 1
    %s665 = scalar_lea.sflag [#allocation3], 1
    %666 = vsyncpa %s665, 1
    %667 = vsyncpa [#allocation5], 1
    %s668 = scalar_lea.sflag [#allocation5], 1
    %669 = vsyncpa %s668, 1

</llo_original>
